<compile_context>
chip_gen: v6e
topology: v6e:2x2x1
jax: 0.10.0
libtpu: 0.0.40
codegen_flags: <defaults>
</compile_context>

<pallas_src>
import functools

import jax
import jax.numpy as jnp
from jax import lax
from jax.experimental import pallas as pl
from jax.experimental.pallas import tpu as pltpu


def _attention_kernel(x_ref, wqkv_ref, wout_ref, bout_ref, o_ref, out_sc, *,
                      heads, dim_head, block_b, seq_len):
    """One grid step = `block_b` batch elements, full sequence.

    x_ref   : (block_b, N, D)      bf16
    wqkv_ref: (D, 3*inner)         bf16  (softmax scale pre-folded into Q columns)
    wout_ref: (inner, D)           bf16
    bout_ref: (1, D)               f32
    o_ref   : (block_b, N, D)      output dtype
    out_sc  : (block_b*N, inner)   bf16 VMEM scratch (per-head results land in lane slices)
    """
    inner = heads * dim_head
    n = seq_len
    d = x_ref.shape[-1]

    # QKV projection for every token in the block at once (maximizes MXU M).
    x = x_ref[...].reshape(block_b * n, d)                  # merge leading dims, no lane relayout
    qkv = jnp.dot(x, wqkv_ref[...], preferred_element_type=jnp.float32)  # (block_b*N, 3*inner) f32

    # Per-(batch-in-block, head) attention via static lane slices:
    # no (1,0,2) transposes (XLU relayouts), no lane concatenates.
    # TODO(synk): for production N, add a Q-tile grid axis with flash-style
    # online-softmax accumulators (init/finalize via pl.when) to cap the
    # per-step (N, N) dots footprint; at N=8 it is irrelevant.
    for b in range(block_b):
        rows = slice(b * n, (b + 1) * n)
        for h in range(heads):
            q_lanes = slice(h * dim_head, (h + 1) * dim_head)
            k_lanes = slice(inner + h * dim_head, inner + (h + 1) * dim_head)
            v_lanes = slice(2 * inner + h * dim_head, 2 * inner + (h + 1) * dim_head)

            q = qkv[rows, q_lanes].astype(jnp.bfloat16)     # scale already folded into Wqkv
            k = qkv[rows, k_lanes].astype(jnp.bfloat16)
            v = qkv[rows, v_lanes].astype(jnp.bfloat16)

            # q @ k^T through dot_general dimension numbers (no explicit transpose).
            dots = lax.dot_general(q, k, (((1,), (1,)), ((), ())),
                                   preferred_element_type=jnp.float32)      # (N, N) f32

            # Numerically stable softmax, kept in f32 (VPU/EUP fast path).
            m = jnp.max(dots, axis=-1, keepdims=True)
            p = jnp.exp(dots - m)
            denom = jnp.sum(p, axis=-1, keepdims=True)
            attn = (p * pl.reciprocal(denom, approx=True)).astype(jnp.bfloat16)

            out_h = jnp.dot(attn, v, preferred_element_type=jnp.float32)    # (N, dim_head) f32
            out_sc[rows, q_lanes] = out_h.astype(jnp.bfloat16)

    # Output projection (to_out Linear; Dropout(p=0.0) is identity).
    proj = jnp.dot(out_sc[...], wout_ref[...], preferred_element_type=jnp.float32)
    proj = proj + bout_ref[...]
    o_ref[...] = proj.reshape(block_b, n, -1).astype(o_ref.dtype)


def attention_pallas(x, w_qkv, w_out, b_out, *, heads, dim_head, block_b=1):
    B, N, D = x.shape
    inner = heads * dim_head
    scale = dim_head ** (-0.5)
    assert B % block_b == 0, "block_b must divide the batch"

    # Fold the softmax scale into the Q columns of Wqkv (amortized over all
    # tokens); then stream weights and activations as bf16 (halves HBM traffic
    # and VMEM footprint; MXU accumulation stays f32 in-kernel).
    w_qkv_scaled = w_qkv.at[:, :inner].multiply(scale)
    w_qkv_bf = w_qkv_scaled.astype(jnp.bfloat16)
    w_out_bf = w_out.astype(jnp.bfloat16)
    x_bf = x.astype(jnp.bfloat16)
    b_out_2d = b_out.reshape(1, D).astype(jnp.float32)

    kernel = functools.partial(_attention_kernel, heads=heads, dim_head=dim_head,
                               block_b=block_b, seq_len=N)

    grid = (B // block_b,)
    return pl.pallas_call(
        kernel,
        out_shape=jax.ShapeDtypeStruct((B, N, D), x.dtype),
        grid_spec=pltpu.PrefetchScalarGridSpec(
            num_scalar_prefetch=0,
            grid=grid,
            in_specs=[
                # Streaming activation block, double-buffered by default.
                pl.BlockSpec((block_b, N, D), lambda b: (b, 0, 0)),
                # Broadcast (grid-invariant) weights/bias: single-buffered.
                pl.BlockSpec((D, 3 * inner), lambda b: (0, 0),
                             pipeline_mode=pl.Buffered(buffer_count=1)),
                pl.BlockSpec((inner, D), lambda b: (0, 0),
                             pipeline_mode=pl.Buffered(buffer_count=1)),
                pl.BlockSpec((1, D), lambda b: (0, 0),
                             pipeline_mode=pl.Buffered(buffer_count=1)),
            ],
            out_specs=pl.BlockSpec((block_b, N, D), lambda b: (b, 0, 0)),
            scratch_shapes=[pltpu.VMEM((block_b * N, inner), jnp.bfloat16)],
        ),
        compiler_params=pltpu.CompilerParams(
            dimension_semantics=("parallel",),
            # Explicit budget so the same config is safe on v5e/v6e/v7x.
            vmem_limit_bytes=32 * 1024 * 1024,
        ),
    )(x_bf, w_qkv_bf, w_out_bf, b_out_2d)


def attention_reference(x, w_qkv, w_out, b_out, *, heads, dim_head):
    B, N, D = x.shape
    inner = heads * dim_head
    scale = dim_head ** (-0.5)
    qkv = x @ w_qkv                                   # (B, N, 3*inner)
    q, k, v = jnp.split(qkv, 3, axis=-1)

    def to_heads(t):                                  # 'b n (h d) -> b h n d'
        return t.reshape(B, N, heads, dim_head).transpose(0, 2, 1, 3)

    q, k, v = map(to_heads, (q, k, v))
    dots = jnp.einsum('bhnd,bhmd->bhnm', q, k) * scale
    attn = jax.nn.softmax(dots, axis=-1)
    out = jnp.einsum('bhnm,bhmd->bhnd', attn, v)
    out = out.transpose(0, 2, 1, 3).reshape(B, N, inner)  # 'b h n d -> b n (h d)'
    return out @ w_out + b_out


if __name__ == "__main__":
    # Small shapes consistent with the module.
    B, N = 2, 8
    dim = 32
    heads = 4
    dim_head = 8
    inner = heads * dim_head  # 32; project_out=True since heads != 1

    key = jax.random.PRNGKey(0)
    kx, kq, ko, kb = jax.random.split(key, 4)

    x = jax.random.normal(kx, (B, N, dim), dtype=jnp.float32)
    # Deterministic synthetic parameters (stored as (in, out)).
    w_qkv = jax.random.normal(kq, (dim, 3 * inner), dtype=jnp.float32) * 0.05
    w_out = jax.random.normal(ko, (inner, dim), dtype=jnp.float32) * 0.05
    b_out = jax.random.normal(kb, (dim,), dtype=jnp.float32) * 0.05

    y = attention_pallas(x, w_qkv, w_out, b_out, heads=heads, dim_head=dim_head)
    y = jax.block_until_ready(y)

    y_ref = attention_reference(x, w_qkv, w_out, b_out, heads=heads, dim_head=dim_head)
    # bf16 MXU operands with f32 accumulation -> looser tolerance than pure f32.
    assert jnp.allclose(y, y_ref, atol=2e-2, rtol=2e-2), "Pallas output mismatch vs reference"

    print("KERNEL_OK")
</pallas_src>

<mosaic_0001>
module attributes {stable_mosaic.version = 11 : i64} {
  func.func @_attention_kernel(%arg0: i32, %arg1: memref<1x8x32xbf16, #tpu.memory_space<vmem>>, %arg2: memref<32x96xbf16, #tpu.memory_space<vmem>>, %arg3: memref<32x32xbf16, #tpu.memory_space<vmem>>, %arg4: memref<1x32xf32, #tpu.memory_space<vmem>>, %arg5: memref<1x8x32xf32, #tpu.memory_space<vmem>>, %arg6: memref<8x32xbf16, #tpu.memory_space<vmem>>) attributes {dimension_semantics = [#tpu.dimension_semantics<parallel>], iteration_bounds = array<i64: 2>, scalar_prefetch = 0 : i64, scratch_operands = 1 : i64, tpu.core_type = #tpu.core_type<tc>, window_params = [{transform_indices = @transform_0, window_bounds = array<i64: 1, 8, 32>}, {pipeline_mode = #tpu.pipeline_mode<synchronous>, transform_indices = @transform_1, window_bounds = array<i64: 32, 96>}, {pipeline_mode = #tpu.pipeline_mode<synchronous>, transform_indices = @transform_2, window_bounds = array<i64: 32, 32>}, {pipeline_mode = #tpu.pipeline_mode<synchronous>, transform_indices = @transform_3, window_bounds = array<i64: 1, 32>}, {transform_indices = @transform_4, window_bounds = array<i64: 1, 8, 32>}]} {
    %c0 = arith.constant 0 : index
    %c0_0 = arith.constant 0 : index
    %c0_1 = arith.constant 0 : index
    %0 = vector.load %arg1[%c0, %c0_0, %c0_1] : memref<1x8x32xbf16, #tpu.memory_space<vmem>>, vector<1x8x32xbf16>
    %1 = vector.shape_cast %0 : vector<1x8x32xbf16> to vector<8x32xbf16>
    %c0_2 = arith.constant 0 : index
    %c0_3 = arith.constant 0 : index
    %2 = vector.load %arg2[%c0_2, %c0_3] : memref<32x96xbf16, #tpu.memory_space<vmem>>, vector<32x96xbf16>
    %cst = arith.constant dense<0.000000e+00> : vector<8x96xf32>
    %3 = tpu.matmul %1, %2, %cst {dimension_numbers = #tpu.dot_dimension_numbers<[1], [0], [0], [1], [0, 0, 1, 1], [], []>} : vector<8x32xbf16>, vector<32x96xbf16>, vector<8x96xf32> -> vector<8x96xf32>
    %4 = vector.extract_strided_slice %3 {offsets = [0, 0], sizes = [8, 8], strides = [1, 1]} : vector<8x96xf32> to vector<8x8xf32>
    %5 = arith.truncf %4 : vector<8x8xf32> to vector<8x8xbf16>
    %6 = vector.extract_strided_slice %3 {offsets = [0, 32], sizes = [8, 8], strides = [1, 1]} : vector<8x96xf32> to vector<8x8xf32>
    %7 = arith.truncf %6 : vector<8x8xf32> to vector<8x8xbf16>
    %8 = vector.extract_strided_slice %3 {offsets = [0, 64], sizes = [8, 8], strides = [1, 1]} : vector<8x96xf32> to vector<8x8xf32>
    %9 = arith.truncf %8 : vector<8x8xf32> to vector<8x8xbf16>
    %cst_4 = arith.constant dense<0.000000e+00> : vector<8x8xf32>
    %10 = tpu.matmul %5, %7, %cst_4 {dimension_numbers = #tpu.dot_dimension_numbers<[1], [1], [0], [0], [0, 0, 1, 0], [], []>} : vector<8x8xbf16>, vector<8x8xbf16>, vector<8x8xf32> -> vector<8x8xf32>
    %cst_5 = arith.constant dense<0xFF800000> : vector<8xf32>
    %11 = vector.multi_reduction <maximumf>, %10, %cst_5 [1] : vector<8x8xf32> to vector<8xf32>
    %12 = vector.shape_cast %11 : vector<8xf32> to vector<8x1xf32>
    %13 = vector.broadcast %12 : vector<8x1xf32> to vector<8x8xf32>
    %14 = arith.subf %10, %13 : vector<8x8xf32>
    %15 = math.exp %14 : vector<8x8xf32>
    %cst_6 = arith.constant dense<0.000000e+00> : vector<8xf32>
    %16 = vector.multi_reduction <add>, %15, %cst_6 [1] : vector<8x8xf32> to vector<8xf32>
    %17 = vector.shape_cast %16 : vector<8xf32> to vector<8x1xf32>
    %18 = tpu.reciprocal %17 {approx = true} : vector<8x1xf32> -> vector<8x1xf32>
    %19 = vector.broadcast %18 : vector<8x1xf32> to vector<8x8xf32>
    %20 = arith.mulf %15, %19 : vector<8x8xf32>
    %21 = arith.truncf %20 : vector<8x8xf32> to vector<8x8xbf16>
    %cst_7 = arith.constant dense<0.000000e+00> : vector<8x8xf32>
    %22 = tpu.matmul %21, %9, %cst_7 {dimension_numbers = #tpu.dot_dimension_numbers<[1], [0], [0], [1], [0, 0, 1, 1], [], []>} : vector<8x8xbf16>, vector<8x8xbf16>, vector<8x8xf32> -> vector<8x8xf32>
    %23 = arith.truncf %22 : vector<8x8xf32> to vector<8x8xbf16>
    %c0_8 = arith.constant 0 : index
    %c0_9 = arith.constant 0 : index
    %24 = vector.load %arg6[%c0_8, %c0_9] : memref<8x32xbf16, #tpu.memory_space<vmem>>, vector<8x8xbf16>
    tpu.vector_store %arg6[%c0_8, %c0_9], %23 {strides = array<i32>} : memref<8x32xbf16, #tpu.memory_space<vmem>>, vector<8x8xbf16>,
    %25 = vector.extract_strided_slice %3 {offsets = [0, 8], sizes = [8, 8], strides = [1, 1]} : vector<8x96xf32> to vector<8x8xf32>
    %26 = arith.truncf %25 : vector<8x8xf32> to vector<8x8xbf16>
    %27 = vector.extract_strided_slice %3 {offsets = [0, 40], sizes = [8, 8], strides = [1, 1]} : vector<8x96xf32> to vector<8x8xf32>
    %28 = arith.truncf %27 : vector<8x8xf32> to vector<8x8xbf16>
    %29 = vector.extract_strided_slice %3 {offsets = [0, 72], sizes = [8, 8], strides = [1, 1]} : vector<8x96xf32> to vector<8x8xf32>
    %30 = arith.truncf %29 : vector<8x8xf32> to vector<8x8xbf16>
    %cst_10 = arith.constant dense<0.000000e+00> : vector<8x8xf32>
    %31 = tpu.matmul %26, %28, %cst_10 {dimension_numbers = #tpu.dot_dimension_numbers<[1], [1], [0], [0], [0, 0, 1, 0], [], []>} : vector<8x8xbf16>, vector<8x8xbf16>, vector<8x8xf32> -> vector<8x8xf32>
    %cst_11 = arith.constant dense<0xFF800000> : vector<8xf32>
    %32 = vector.multi_reduction <maximumf>, %31, %cst_11 [1] : vector<8x8xf32> to vector<8xf32>
    %33 = vector.shape_cast %32 : vector<8xf32> to vector<8x1xf32>
    %34 = vector.broadcast %33 : vector<8x1xf32> to vector<8x8xf32>
    %35 = arith.subf %31, %34 : vector<8x8xf32>
    %36 = math.exp %35 : vector<8x8xf32>
    %cst_12 = arith.constant dense<0.000000e+00> : vector<8xf32>
    %37 = vector.multi_reduction <add>, %36, %cst_12 [1] : vector<8x8xf32> to vector<8xf32>
    %38 = vector.shape_cast %37 : vector<8xf32> to vector<8x1xf32>
    %39 = tpu.reciprocal %38 {approx = true} : vector<8x1xf32> -> vector<8x1xf32>
    %40 = vector.broadcast %39 : vector<8x1xf32> to vector<8x8xf32>
    %41 = arith.mulf %36, %40 : vector<8x8xf32>
    %42 = arith.truncf %41 : vector<8x8xf32> to vector<8x8xbf16>
    %cst_13 = arith.constant dense<0.000000e+00> : vector<8x8xf32>
    %43 = tpu.matmul %42, %30, %cst_13 {dimension_numbers = #tpu.dot_dimension_numbers<[1], [0], [0], [1], [0, 0, 1, 1], [], []>} : vector<8x8xbf16>, vector<8x8xbf16>, vector<8x8xf32> -> vector<8x8xf32>
    %44 = arith.truncf %43 : vector<8x8xf32> to vector<8x8xbf16>
    %c0_14 = arith.constant 0 : index
    %c8 = arith.constant 8 : index
    %45 = vector.load %arg6[%c0_14, %c8] : memref<8x32xbf16, #tpu.memory_space<vmem>>, vector<8x8xbf16>
    tpu.vector_store %arg6[%c0_14, %c8], %44 {strides = array<i32>} : memref<8x32xbf16, #tpu.memory_space<vmem>>, vector<8x8xbf16>,
    %46 = vector.extract_strided_slice %3 {offsets = [0, 16], sizes = [8, 8], strides = [1, 1]} : vector<8x96xf32> to vector<8x8xf32>
    %47 = arith.truncf %46 : vector<8x8xf32> to vector<8x8xbf16>
    %48 = vector.extract_strided_slice %3 {offsets = [0, 48], sizes = [8, 8], strides = [1, 1]} : vector<8x96xf32> to vector<8x8xf32>
    %49 = arith.truncf %48 : vector<8x8xf32> to vector<8x8xbf16>
    %50 = vector.extract_strided_slice %3 {offsets = [0, 80], sizes = [8, 8], strides = [1, 1]} : vector<8x96xf32> to vector<8x8xf32>
    %51 = arith.truncf %50 : vector<8x8xf32> to vector<8x8xbf16>
    %cst_15 = arith.constant dense<0.000000e+00> : vector<8x8xf32>
    %52 = tpu.matmul %47, %49, %cst_15 {dimension_numbers = #tpu.dot_dimension_numbers<[1], [1], [0], [0], [0, 0, 1, 0], [], []>} : vector<8x8xbf16>, vector<8x8xbf16>, vector<8x8xf32> -> vector<8x8xf32>
    %cst_16 = arith.constant dense<0xFF800000> : vector<8xf32>
    %53 = vector.multi_reduction <maximumf>, %52, %cst_16 [1] : vector<8x8xf32> to vector<8xf32>
    %54 = vector.shape_cast %53 : vector<8xf32> to vector<8x1xf32>
    %55 = vector.broadcast %54 : vector<8x1xf32> to vector<8x8xf32>
    %56 = arith.subf %52, %55 : vector<8x8xf32>
    %57 = math.exp %56 : vector<8x8xf32>
    %cst_17 = arith.constant dense<0.000000e+00> : vector<8xf32>
    %58 = vector.multi_reduction <add>, %57, %cst_17 [1] : vector<8x8xf32> to vector<8xf32>
    %59 = vector.shape_cast %58 : vector<8xf32> to vector<8x1xf32>
    %60 = tpu.reciprocal %59 {approx = true} : vector<8x1xf32> -> vector<8x1xf32>
    %61 = vector.broadcast %60 : vector<8x1xf32> to vector<8x8xf32>
    %62 = arith.mulf %57, %61 : vector<8x8xf32>
    %63 = arith.truncf %62 : vector<8x8xf32> to vector<8x8xbf16>
    %cst_18 = arith.constant dense<0.000000e+00> : vector<8x8xf32>
    %64 = tpu.matmul %63, %51, %cst_18 {dimension_numbers = #tpu.dot_dimension_numbers<[1], [0], [0], [1], [0, 0, 1, 1], [], []>} : vector<8x8xbf16>, vector<8x8xbf16>, vector<8x8xf32> -> vector<8x8xf32>
    %65 = arith.truncf %64 : vector<8x8xf32> to vector<8x8xbf16>
    %c0_19 = arith.constant 0 : index
    %c16 = arith.constant 16 : index
    %66 = vector.load %arg6[%c0_19, %c16] : memref<8x32xbf16, #tpu.memory_space<vmem>>, vector<8x8xbf16>
    tpu.vector_store %arg6[%c0_19, %c16], %65 {strides = array<i32>} : memref<8x32xbf16, #tpu.memory_space<vmem>>, vector<8x8xbf16>,
    %67 = vector.extract_strided_slice %3 {offsets = [0, 24], sizes = [8, 8], strides = [1, 1]} : vector<8x96xf32> to vector<8x8xf32>
    %68 = arith.truncf %67 : vector<8x8xf32> to vector<8x8xbf16>
    %69 = vector.extract_strided_slice %3 {offsets = [0, 56], sizes = [8, 8], strides = [1, 1]} : vector<8x96xf32> to vector<8x8xf32>
    %70 = arith.truncf %69 : vector<8x8xf32> to vector<8x8xbf16>
    %71 = vector.extract_strided_slice %3 {offsets = [0, 88], sizes = [8, 8], strides = [1, 1]} : vector<8x96xf32> to vector<8x8xf32>
    %72 = arith.truncf %71 : vector<8x8xf32> to vector<8x8xbf16>
    %cst_20 = arith.constant dense<0.000000e+00> : vector<8x8xf32>
    %73 = tpu.matmul %68, %70, %cst_20 {dimension_numbers = #tpu.dot_dimension_numbers<[1], [1], [0], [0], [0, 0, 1, 0], [], []>} : vector<8x8xbf16>, vector<8x8xbf16>, vector<8x8xf32> -> vector<8x8xf32>
    %cst_21 = arith.constant dense<0xFF800000> : vector<8xf32>
    %74 = vector.multi_reduction <maximumf>, %73, %cst_21 [1] : vector<8x8xf32> to vector<8xf32>
    %75 = vector.shape_cast %74 : vector<8xf32> to vector<8x1xf32>
    %76 = vector.broadcast %75 : vector<8x1xf32> to vector<8x8xf32>
    %77 = arith.subf %73, %76 : vector<8x8xf32>
    %78 = math.exp %77 : vector<8x8xf32>
    %cst_22 = arith.constant dense<0.000000e+00> : vector<8xf32>
    %79 = vector.multi_reduction <add>, %78, %cst_22 [1] : vector<8x8xf32> to vector<8xf32>
    %80 = vector.shape_cast %79 : vector<8xf32> to vector<8x1xf32>
    %81 = tpu.reciprocal %80 {approx = true} : vector<8x1xf32> -> vector<8x1xf32>
    %82 = vector.broadcast %81 : vector<8x1xf32> to vector<8x8xf32>
    %83 = arith.mulf %78, %82 : vector<8x8xf32>
    %84 = arith.truncf %83 : vector<8x8xf32> to vector<8x8xbf16>
    %cst_23 = arith.constant dense<0.000000e+00> : vector<8x8xf32>
    %85 = tpu.matmul %84, %72, %cst_23 {dimension_numbers = #tpu.dot_dimension_numbers<[1], [0], [0], [1], [0, 0, 1, 1], [], []>} : vector<8x8xbf16>, vector<8x8xbf16>, vector<8x8xf32> -> vector<8x8xf32>
    %86 = arith.truncf %85 : vector<8x8xf32> to vector<8x8xbf16>
    %c0_24 = arith.constant 0 : index
    %c24 = arith.constant 24 : index
    %87 = vector.load %arg6[%c0_24, %c24] : memref<8x32xbf16, #tpu.memory_space<vmem>>, vector<8x8xbf16>
    tpu.vector_store %arg6[%c0_24, %c24], %86 {strides = array<i32>} : memref<8x32xbf16, #tpu.memory_space<vmem>>, vector<8x8xbf16>,
    %c0_25 = arith.constant 0 : index
    %c0_26 = arith.constant 0 : index
    %88 = vector.load %arg6[%c0_25, %c0_26] : memref<8x32xbf16, #tpu.memory_space<vmem>>, vector<8x32xbf16>
    %c0_27 = arith.constant 0 : index
    %c0_28 = arith.constant 0 : index
    %89 = vector.load %arg3[%c0_27, %c0_28] : memref<32x32xbf16, #tpu.memory_space<vmem>>, vector<32x32xbf16>
    %cst_29 = arith.constant dense<0.000000e+00> : vector<8x32xf32>
    %90 = tpu.matmul %88, %89, %cst_29 {dimension_numbers = #tpu.dot_dimension_numbers<[1], [0], [0], [1], [0, 0, 1, 1], [], []>} : vector<8x32xbf16>, vector<32x32xbf16>, vector<8x32xf32> -> vector<8x32xf32>
    %c0_30 = arith.constant 0 : index
    %c0_31 = arith.constant 0 : index
    %91 = vector.load %arg4[%c0_30, %c0_31] : memref<1x32xf32, #tpu.memory_space<vmem>>, vector<1x32xf32>
    %92 = vector.broadcast %91 : vector<1x32xf32> to vector<8x32xf32>
    %93 = arith.addf %90, %92 : vector<8x32xf32>
    %94 = vector.shape_cast %93 : vector<8x32xf32> to vector<1x8x32xf32>
    %c0_32 = arith.constant 0 : index
    %c0_33 = arith.constant 0 : index
    %c0_34 = arith.constant 0 : index
    %95 = vector.load %arg5[%c0_32, %c0_33, %c0_34] : memref<1x8x32xf32, #tpu.memory_space<vmem>>, vector<1x8x32xf32>
    tpu.vector_store %arg5[%c0_32, %c0_33, %c0_34], %94 {strides = array<i32>} : memref<1x8x32xf32, #tpu.memory_space<vmem>>, vector<1x8x32xf32>,
    return
  }
  func.func @transform_0(%arg0: i32) -> (i32, i32, i32) {
    %c0_i32 = arith.constant 0 : i32
    %c0_i32_0 = arith.constant 0 : i32
    %c0_i32_1 = arith.constant 0 : i32
    return %arg0, %c0_i32, %c0_i32_0 : i32, i32, i32
  }
  func.func @transform_1(%arg0: i32) -> (i32, i32) {
    %c0_i32 = arith.constant 0 : i32
    %c0_i32_0 = arith.constant 0 : i32
    %c0_i32_1 = arith.constant 0 : i32
    return %c0_i32, %c0_i32_0 : i32, i32
  }
  func.func @transform_2(%arg0: i32) -> (i32, i32) {
    %c0_i32 = arith.constant 0 : i32
    %c0_i32_0 = arith.constant 0 : i32
    %c0_i32_1 = arith.constant 0 : i32
    return %c0_i32, %c0_i32_0 : i32, i32
  }
  func.func @transform_3(%arg0: i32) -> (i32, i32) {
    %c0_i32 = arith.constant 0 : i32
    %c0_i32_0 = arith.constant 0 : i32
    %c0_i32_1 = arith.constant 0 : i32
    return %c0_i32, %c0_i32_0 : i32, i32
  }
  func.func @transform_4(%arg0: i32) -> (i32, i32, i32) {
    %c0_i32 = arith.constant 0 : i32
    %c0_i32_0 = arith.constant 0 : i32
    %c0_i32_1 = arith.constant 0 : i32
    return %arg0, %c0_i32, %c0_i32_0 : i32, i32, i32
  }
}

</mosaic_0001>

<llo_original>
// kernel: tpu_custom_call.1
$region0: #{tpu_custom_call.1}
  #allocation0 [shape = 'u32[]', space=smem, size = 0x4, offset = 0x4, fixed_abs, tag = 'smem constant byte address 0x4 - core index']
  #allocation1 [shape = 'u32[144,128]{1,0:T(1,128)}', space=vmem, size = 0x12000, scoped, tag = 'internal scratch']
  #allocation2 [shape = 'bf16[8,32]{1,0:T(8,128)(2,1)}', space=vmem, size = 0x800, scoped, tag = 'scratch operand']
  %s0 = inlined_call_operand.hbm [shape: bf16[2,8,32], index: 0, kind: input, shape index: {}]
  %s1 = inlined_call_operand.hbm [shape: bf16[32,96], index: 1, kind: input, shape index: {}]
  %s2 = inlined_call_operand.hbm [shape: bf16[32,32], index: 2, kind: input, shape index: {}]
  %s3 = inlined_call_operand.vmem [shape: f32[1,32], index: 3, kind: input, shape index: {}]
  %s4 = inlined_call_operand.hbm [shape: f32[2,8,32], index: 4, kind: output, shape index: {}]
  %s5 = sld [smem:[#allocation0]]
  $region61: #{tpu_custom_call.1} parent=0
    _
  %s7 = ssub.s32 1, %s5
  %s8 = scalar_select 0, %s7, %s5
  $region1: #{tpu_custom_call.1} parent=0
    #allocation3 [shape = 'u8[4096]{0}', space=vmem, size = 0x1000, scoped, tag = 'input window, operand 0']
    #allocation4 [shape = 's32[2]{0}', space=sflag, size = 0x8, scoped, tag = 'scoped memory for tpu_custom_call.1']
    #allocation5 [shape = 's32[2]{0}', space=sflag, size = 0x8, scoped, tag = 'scoped memory for tpu_custom_call.1']
    #allocation6 [shape = 'u8[8192]{0}', space=vmem, size = 0x2000, scoped, tag = 'input window, operand 1, single buffered']
    #allocation7 [shape = 's32[1]{0}', space=sflag, size = 0x4, scoped, tag = 'scoped memory for tpu_custom_call.1']
    #allocation8 [shape = 'u8[8192]{0}', space=vmem, size = 0x2000, scoped, tag = 'input window, operand 2, single buffered']
    #allocation9 [shape = 'u8[8192]{0}', space=vmem, size = 0x2000, scoped, tag = 'output window, operand 0']
    %9 = vsyncpa [#allocation4], 0
    %s10 = scalar_lea.sflag [#allocation4], 1
    %11 = vsyncpa %s10, 0
    %12 = vsyncpa [#allocation7], 0
    %13 = vsyncpa [#allocation5], 0
    %s14 = scalar_lea.sflag [#allocation5], 1
    %15 = vsyncpa %s14, 0
    loop: start=0, step=1, limit=4
    $region2: #{tpu_custom_call.1} parent=1 // loop_pre_header
      _
    $region3: #{tpu_custom_call.1} parent=1 // loop_header
      %s17 = sphi 0, %s21
      %p18 = scmp.ge.s32.totalorder %s17, 4
      %s27 = sphi 0, %s29
      %s30 = sphi 0, %s27
      %s31 = sphi 0, %s30
      %s47 = sphi 0, %s31
      %s51 = sphi 0, %s51
      %s53 = sphi 0, %s51
      %s54 = sphi 0, %s53
      %s68 = sphi 0, %s54
      %s72 = sphi 0, %s72
      %s74 = sphi 0, %s72
      %s75 = sphi 0, %s74
      %s89 = sphi 0, %s75
      %s93 = sphi 0, %s93
      %s95 = sphi 0, %s93
      %s96 = sphi 0, %s95
      %s110 = sphi 0, %s96
      %s116 = sphi 0, %s118
      %s119 = sphi 0, %s116
      %s120 = sphi 0, %s119
      %s136 = sphi 0, %s120
    $region4: #{tpu_custom_call.1} parent=1 // loop_header_branch
      %20 = sbr.rel (%p18) target = $region8
    $region5: #{tpu_custom_call.1} parent=1 // loop_body
      %s22 = ssub.s32 %s17, 1
      %s23 = ssub.s32 %s17, 2
      %s24 = sadd.s32 %s17, 1
      %s25 = ssub.s32 %s17, %s24
      %p26 = scmp.eq.s32.totalorder %s25, 0
      %s28 = sadd.s32 %s27, 1
      %s29 = scalar_select %p26, %s27, %s28
      %p32 = pneg %p26
      %p33 = scmp.eq.s32.totalorder %s17, 1
      %p34 = por %p32, %p33
      %p35 = scmp.ne.s32.totalorder %s27, %s30
      %p36 = scmp.eq.s32.totalorder %s17, 0
      %p37 = por %p35, %p36
      %p38 = scmp.ne.s32.totalorder %s27, %s30
      %p39 = scmp.eq.s32.totalorder %s22, 1
      %p40 = por %p38, %p39
      %p41 = scmp.ne.s32.totalorder %s30, %s31
      %p42 = scmp.eq.s32.totalorder %s22, 0
      %p43 = por %p41, %p42
      %p44 = scmp.ne.s32.totalorder %s30, %s31
      %p45 = scmp.eq.s32.totalorder %s23, 1
      %p46 = por %p44, %p45
      %p48 = scmp.ne.s32.totalorder %s31, %s47
      %p49 = scmp.eq.s32.totalorder %s23, 0
      %p50 = por %p48, %p49
      %s52 = sadd.s32 %s51, 1
      %p55 = scmp.eq.s32.totalorder %s17, 1
      %p56 = scmp.ne.s32.totalorder %s51, %s53
      %p57 = scmp.eq.s32.totalorder %s17, 0
      %p58 = por %p56, %p57
      %p59 = scmp.ne.s32.totalorder %s51, %s53
      %p60 = scmp.eq.s32.totalorder %s22, 1
      %p61 = por %p59, %p60
      %p62 = scmp.ne.s32.totalorder %s53, %s54
      %p63 = scmp.eq.s32.totalorder %s22, 0
      %p64 = por %p62, %p63
      %p65 = scmp.ne.s32.totalorder %s53, %s54
      %p66 = scmp.eq.s32.totalorder %s23, 1
      %p67 = por %p65, %p66
      %p69 = scmp.ne.s32.totalorder %s54, %s68
      %p70 = scmp.eq.s32.totalorder %s23, 0
      %p71 = por %p69, %p70
      %s73 = sadd.s32 %s72, 1
      %p76 = scmp.eq.s32.totalorder %s17, 1
      %p77 = scmp.ne.s32.totalorder %s72, %s74
      %p78 = scmp.eq.s32.totalorder %s17, 0
      %p79 = por %p77, %p78
      %p80 = scmp.ne.s32.totalorder %s72, %s74
      %p81 = scmp.eq.s32.totalorder %s22, 1
      %p82 = por %p80, %p81
      %p83 = scmp.ne.s32.totalorder %s74, %s75
      %p84 = scmp.eq.s32.totalorder %s22, 0
      %p85 = por %p83, %p84
      %p86 = scmp.ne.s32.totalorder %s74, %s75
      %p87 = scmp.eq.s32.totalorder %s23, 1
      %p88 = por %p86, %p87
      %p90 = scmp.ne.s32.totalorder %s75, %s89
      %p91 = scmp.eq.s32.totalorder %s23, 0
      %p92 = por %p90, %p91
      %s94 = sadd.s32 %s93, 1
      %p97 = scmp.eq.s32.totalorder %s17, 1
      %p98 = scmp.ne.s32.totalorder %s93, %s95
      %p99 = scmp.eq.s32.totalorder %s17, 0
      %p100 = por %p98, %p99
      %p101 = scmp.ne.s32.totalorder %s93, %s95
      %p102 = scmp.eq.s32.totalorder %s22, 1
      %p103 = por %p101, %p102
      %p104 = scmp.ne.s32.totalorder %s95, %s96
      %p105 = scmp.eq.s32.totalorder %s22, 0
      %p106 = por %p104, %p105
      %p107 = scmp.ne.s32.totalorder %s95, %s96
      %p108 = scmp.eq.s32.totalorder %s23, 1
      %p109 = por %p107, %p108
      %p111 = scmp.ne.s32.totalorder %s96, %s110
      %p112 = scmp.eq.s32.totalorder %s23, 0
      %p113 = por %p111, %p112
      %s114 = ssub.s32 %s17, %s24
      %p115 = scmp.eq.s32.totalorder %s114, 0
      %s117 = sadd.s32 %s116, 1
      %s118 = scalar_select %p115, %s116, %s117
      %p121 = pneg %p115
      %p122 = scmp.eq.s32.totalorder %s17, 1
      %p123 = por %p121, %p122
      %p124 = scmp.ne.s32.totalorder %s116, %s119
      %p125 = scmp.eq.s32.totalorder %s17, 0
      %p126 = por %p124, %p125
      %p127 = scmp.ne.s32.totalorder %s116, %s119
      %p128 = scmp.eq.s32.totalorder %s22, 1
      %p129 = por %p127, %p128
      %p130 = scmp.ne.s32.totalorder %s119, %s120
      %p131 = scmp.eq.s32.totalorder %s22, 0
      %p132 = por %p130, %p131
      %p133 = scmp.ne.s32.totalorder %s119, %s120
      %p134 = scmp.eq.s32.totalorder %s23, 1
      %p135 = por %p133, %p134
      %p137 = scmp.ne.s32.totalorder %s120, %s136
      %p138 = scmp.eq.s32.totalorder %s23, 0
      %p139 = por %p137, %p138
      %p140 = scmp.le.s32.totalorder 1, %s17
      %p141 = scmp.lt.s32.totalorder %s17, 3
      %p142 = pnand %p140, %p141
      %p143 = pneg %p142
      // Predicated region
      $region9: #{tpu_custom_call.1} parent=5 // pred_check
        _
      $region10: #{tpu_custom_call.1} parent=5 // pred_check_branch
        %145 = sbr.rel (%p142) target = $region12
      $region11: #{tpu_custom_call.1} parent=5 // pred_region
        %s146 = ssub.s32 %s17, 1
        // Predicated region
        $region13: #{tpu_custom_call.1} parent=11 // pred_check
          %p147 = pneg %p64
        $region14: #{tpu_custom_call.1} parent=11 // pred_check_branch
          %149 = sbr.rel (%p147) target = $region16
        $region15: #{tpu_custom_call.1} parent=11 // pred_region
          %s151 = ssub.s32 256, 256
          %152 = vsyncadd [#allocation7], %s151
          %s153 = sshll.u32 [#allocation6], 4
          %s154 = int_to_ptr.vmem [resolvable:$true] %s153
          %159 = dma.hbm_to_vmem [thread:$0]  %s1, 256, %s154, [#allocation7], 64, 64, 4
        $region16: #{tpu_custom_call.1} parent=11 // pred_fallthru
          _
        // Predicated region
        $region17: #{tpu_custom_call.1} parent=11 // pred_check
          %p160 = pneg %p85
        $region18: #{tpu_custom_call.1} parent=11 // pred_check_branch
          %162 = sbr.rel (%p160) target = $region20
        $region19: #{tpu_custom_call.1} parent=11 // pred_region
          %s164 = ssub.s32 256, 256
          %165 = vsyncadd [#allocation7], %s164
          %s166 = sshll.u32 [#allocation8], 4
          %s167 = int_to_ptr.vmem [resolvable:$true] %s166
          %172 = dma.hbm_to_vmem [thread:$0]  %s2, 256, %s167, [#allocation7], 64, 64, 4
        $region20: #{tpu_custom_call.1} parent=11 // pred_fallthru
          _
        // Predicated region
        $region21: #{tpu_custom_call.1} parent=11 // pred_check
          %p173 = pneg %p106
        $region22: #{tpu_custom_call.1} parent=11 // pred_check_branch
          %175 = sbr.rel (%p173) target = $region24
        $region23: #{tpu_custom_call.1} parent=11 // pred_region
          _
        $region24: #{tpu_custom_call.1} parent=11 // pred_fallthru
          _
      $region12: #{tpu_custom_call.1} parent=5 // pred_fallthru
        _
      %p176 = scmp.lt.s32.totalorder %s17, 2
      // Predicated region
      $region25: #{tpu_custom_call.1} parent=5 // pred_check
        %p177 = pneg %p176
      $region26: #{tpu_custom_call.1} parent=5 // pred_check_branch
        %179 = sbr.rel (%p177) target = $region28
      $region27: #{tpu_custom_call.1} parent=5 // pred_region
        // Predicated region
        $region29: #{tpu_custom_call.1} parent=27 // pred_check
          %p180 = pneg %p37
        $region30: #{tpu_custom_call.1} parent=27 // pred_check_branch
          %182 = sbr.rel (%p180) target = $region32
        $region31: #{tpu_custom_call.1} parent=27 // pred_region
          %s183 = sand.u32 %s27, 1
          %s184 = scalar_lea.sflag [#allocation4], %s183
          %s185 = sand.u32 %s27, 1
          %s186 = smul.addr %s185, 4
          %s187 = scalar_lea.vmem [#allocation3], %s186
          %s189 = ssub.s32 64, 64
          %190 = vsyncadd %s184, %s189
          %s191 = smul.addr %s17, 64
          %s192 = scalar_lea.hbm %s0, %s191
          %s194 = sshll.u32 %s187, 4
          %s195 = int_to_ptr.vmem [resolvable:$true] %s194
          %197 = dma.hbm_to_vmem [thread:$0]  %s192, 64, %s195, %s184
        $region32: #{tpu_custom_call.1} parent=27 // pred_fallthru
          _
      $region28: #{tpu_custom_call.1} parent=5 // pred_fallthru
        _
      %p198 = scmp.le.s32.totalorder 1, %s17
      %p199 = scmp.lt.s32.totalorder %s17, 3
      %p200 = pnand %p198, %p199
      %p201 = pneg %p200
      // Predicated region
      $region33: #{tpu_custom_call.1} parent=5 // pred_check
        _
      $region34: #{tpu_custom_call.1} parent=5 // pred_check_branch
        %203 = sbr.rel (%p200) target = $region36
      $region35: #{tpu_custom_call.1} parent=5 // pred_region
        %s204 = ssub.s32 %s17, 1
        %s205 = sand.u32 %s30, 1
        %s206 = scalar_lea.sflag [#allocation4], %s205
        %s207 = sand.u32 %s30, 1
        %s208 = smul.addr %s207, 4
        %s209 = scalar_lea.vmem [#allocation3], %s208
        // Predicated region
        $region37: #{tpu_custom_call.1} parent=35 // pred_check
          %p210 = pneg %p43
        $region38: #{tpu_custom_call.1} parent=35 // pred_check_branch
          %212 = sbr.rel (%p210) target = $region40
        $region39: #{tpu_custom_call.1} parent=35 // pred_region
          %213 = dma.done %s206, 64
        $region40: #{tpu_custom_call.1} parent=35 // pred_fallthru
          _
        // Predicated region
        $region41: #{tpu_custom_call.1} parent=35 // pred_check
          %p214 = pneg %p64
        $region42: #{tpu_custom_call.1} parent=35 // pred_check_branch
          %216 = sbr.rel (%p214) target = $region44
        $region43: #{tpu_custom_call.1} parent=35 // pred_region
          %217 = dma.done [#allocation7], 256
        $region44: #{tpu_custom_call.1} parent=35 // pred_fallthru
          _
        // Predicated region
        $region45: #{tpu_custom_call.1} parent=35 // pred_check
          %p218 = pneg %p85
        $region46: #{tpu_custom_call.1} parent=35 // pred_check_branch
          %220 = sbr.rel (%p218) target = $region48
        $region47: #{tpu_custom_call.1} parent=35 // pred_region
          %221 = dma.done [#allocation7], 256
        $region48: #{tpu_custom_call.1} parent=35 // pred_fallthru
          _
        %s222 = sand.u32 %s30, 1
        %s223 = scalar_lea.sflag [#allocation4], %s222
        %s224 = sand.u32 %s30, 1
        %s225 = smul.addr %s224, 4
        %s226 = scalar_lea.vmem [#allocation3], %s225
        %p227 = pneg %p43
        %p228 = pneg %p40
        %p229 = pneg %p64
        %p230 = pneg %p61
        %p231 = pneg %p85
        %p232 = pneg %p82
        %p233 = pneg %p106
        %p234 = pneg %p103
        %p235 = pneg %p132
        %p236 = pneg %p129
        %s237 = sand.u32 %s119, 1
        %s238 = scalar_lea.sflag [#allocation5], %s237
        %s239 = sand.u32 %s119, 1
        %s240 = smul.addr %s239, 8
        %s241 = scalar_lea.vmem [#allocation9], %s240
        %v243 = vld [vmem:[%s209] sm:$0xf]
        %v244 = vld [vmem:[#allocation6] sm:$0xf]
        %v245 = vld [vmem:[#allocation6 + $0x4] sm:$0xf]
        %v246 = vld [vmem:[#allocation6 + $0x8] sm:$0xf]
        %v247 = vld [vmem:[#allocation6 + $0xc] sm:$0xf]
        %v252 = vunpack.c.l.b16 %v244
        %v253 = vunpack.c.l.b16 %v245
        %v254 = vunpack.c.l.b16 %v246
        %v255 = vunpack.c.l.b16 %v247
        %v256 = vpack.c.b16 %v253, %v252
        %v257 = vpack.c.b16 %v255, %v254
        %vm260 = vcmask 261120
        %v262 = vsel %vm260, %v243, 0
        %264 = vmatprep.subr.bf16.mxu0 0
        %265 = vmatpush1.bf16.msra.mxu0 0
        %266 = vmatprep.subr.bf16.mxu0 0
        %267 = vmatpush1.bf16.msra.mxu0 0
        %268 = vmatprep.subr.bf16.mxu0 0
        %269 = vmatpush1.bf16.msra.mxu0 0
        %270 = vmatprep.subr.bf16.mxu0 0
        %271 = vmatpush1.bf16.msra.mxu0 0
        %272 = vmatprep.subr.bf16.mxu0 0
        %273 = vmatpush1.bf16.msra.mxu0 0
        %274 = vmatprep.subr.bf16.mxu0 0
        %275 = vmatpush1.bf16.msra.mxu0 0
        %276 = vmatprep.subr.bf16.mxu0 0
        %277 = vmatpush1.bf16.msra.mxu0 %v257
        %278 = vmatprep.subr.bf16.mxu0 0
        %279 = vmatpush1.bf16.msra.mxu0 %v256
        %280 = vmatprep.subr.bf16.mxu0 0
        %281 = vmatpush2.bf16.msra.mxu0 0
        %282 = vmatprep.subr.bf16.mxu0 0
        %283 = vmatpush2.bf16.msra.mxu0 0
        %284 = vmatprep.subr.bf16.mxu0 0
        %285 = vmatpush2.bf16.msra.mxu0 0
        %286 = vmatprep.subr.bf16.mxu0 0
        %287 = vmatpush2.bf16.msra.mxu0 0
        %288 = vmatprep.subr.bf16.mxu0 0
        %289 = vmatpush2.bf16.msra.mxu0 0
        %290 = vmatprep.subr.bf16.mxu0 0
        %291 = vmatpush2.bf16.msra.mxu0 0
        %292 = vmatprep.subr.bf16.mxu0 0
        %293 = vmatpush2.bf16.msra.mxu0 0
        %294 = vmatprep.subr.bf16.mxu0 0
        %295 = vmatpush2.bf16.msra.mxu0 0
        %296 = vmatprep.mubr.bf16.mxu0 0
        %297 = vmatmul.mubr.bf16.gmra.mxu0 %v262
        %v298 = vpop.f32.mrf.mxu0
        %v299 = vadd.f32 0.0, %v298
        %v300 = vpop.f32.mrf.mxu0
        %v301 = vpop.f32.mrf.mxu0
        %v302 = vpop.f32.mrf.mxu0
        %303 = vdwg.mxu0
        %v304 = vpack.c.bf16 %v299, %v299
        %306 = vrot.lane.b32.xlu0 %v304, 96
        %v307 = vpop.permute.xlu0 %306
        %vm308 = vcmask 64512
        %v310 = vsel %vm308, %v304, 0
        %v313 = vsel %vm308, %v307, 0
        %315 = vmatprep.subr.bf16.mxu0 0
        %316 = vmatpush1.bf16.xpose.msra.mxu0 0
        %317 = vmatprep.subr.bf16.mxu0 0
        %318 = vmatpush1.bf16.xpose.msra.mxu0 0
        %319 = vmatprep.subr.bf16.mxu0 0
        %320 = vmatpush1.bf16.xpose.msra.mxu0 0
        %321 = vmatprep.subr.bf16.mxu0 0
        %322 = vmatpush1.bf16.xpose.msra.mxu0 0
        %323 = vmatprep.subr.bf16.mxu0 0
        %324 = vmatpush1.bf16.xpose.msra.mxu0 0
        %325 = vmatprep.subr.bf16.mxu0 0
        %326 = vmatpush1.bf16.xpose.msra.mxu0 0
        %327 = vmatprep.subr.bf16.mxu0 0
        %328 = vmatpush1.bf16.xpose.msra.mxu0 0
        %329 = vmatprep.subr.bf16.mxu0 0
        %330 = vmatpush1.bf16.xpose.msra.mxu0 %v313
        %331 = vmatprep.subr.bf16.mxu0 0
        %332 = vmatpush2.bf16.xpose.msra.mxu0 0
        %333 = vmatprep.subr.bf16.mxu0 0
        %334 = vmatpush2.bf16.xpose.msra.mxu0 0
        %335 = vmatprep.subr.bf16.mxu0 0
        %336 = vmatpush2.bf16.xpose.msra.mxu0 0
        %337 = vmatprep.subr.bf16.mxu0 0
        %338 = vmatpush2.bf16.xpose.msra.mxu0 0
        %339 = vmatprep.subr.bf16.mxu0 0
        %340 = vmatpush2.bf16.xpose.msra.mxu0 0
        %341 = vmatprep.subr.bf16.mxu0 0
        %342 = vmatpush2.bf16.xpose.msra.mxu0 0
        %343 = vmatprep.subr.bf16.mxu0 0
        %344 = vmatpush2.bf16.xpose.msra.mxu0 0
        %345 = vmatprep.subr.bf16.mxu0 0
        %346 = vmatpush2.bf16.xpose.msra.mxu0 0
        %347 = vmatprep.mubr.bf16.mxu0 0
        %348 = vmatmul.mubr.bf16.gmra.mxu0 %v310
        %v349 = vpop.f32.mrf.mxu0
        %v350 = vadd.f32 0.0, %v349
        %v351 = vpop.f32.mrf.mxu0
        %v352 = vpop.f32.mrf.mxu0
        %v353 = vpop.f32.mrf.mxu0
        %354 = vdwg.mxu0
        %v355 = vsel %vm308, %v350, -inf
        %356 = vmax.xlane.f32.xlu0 %v355
        %v357 = vpop.xlane.xlu0 %356
        %v358 = vsub.f32 %v350, %v357
        %v359 = vmul.f32 %v358, 1.442695
        %v360 = vpow.pop %v359
        %v361 = vsel %vm308, %v360, 0.0
        %362 = vadd.xlane.f32.xlu0 %v361
        %v363 = vpop.xlane.xlu0 %362
        %v364 = vrcp.pop %v363
        %v365 = vmul.f32 %v360, %v364
        %v366 = vpack.c.bf16 %v365, %v365
        %367 = vrot.lane.b32.xlu0 %v304, 64
        %v368 = vpop.permute.xlu0 %367
        %v370 = vsel %vm308, %v366, 0
        %vm372 = vcmask 1043456
        %v374 = vsel %vm372, %v368, 0
        %376 = vmatprep.subr.bf16.mxu0 0
        %377 = vmatpush1.bf16.msra.mxu0 0
        %378 = vmatprep.subr.bf16.mxu0 0
        %379 = vmatpush1.bf16.msra.mxu0 0
        %380 = vmatprep.subr.bf16.mxu0 0
        %381 = vmatpush1.bf16.msra.mxu0 0
        %382 = vmatprep.subr.bf16.mxu0 0
        %383 = vmatpush1.bf16.msra.mxu0 0
        %384 = vmatprep.subr.bf16.mxu0 0
        %385 = vmatpush1.bf16.msra.mxu0 0
        %386 = vmatprep.subr.bf16.mxu0 0
        %387 = vmatpush1.bf16.msra.mxu0 0
        %388 = vmatprep.subr.bf16.mxu0 0
        %389 = vmatpush1.bf16.msra.mxu0 0
        %390 = vmatprep.subr.bf16.mxu0 0
        %391 = vmatpush1.bf16.msra.mxu0 %v374
        %392 = vmatprep.subr.bf16.mxu0 0
        %393 = vmatpush2.bf16.msra.mxu0 0
        %394 = vmatprep.subr.bf16.mxu0 0
        %395 = vmatpush2.bf16.msra.mxu0 0
        %396 = vmatprep.subr.bf16.mxu0 0
        %397 = vmatpush2.bf16.msra.mxu0 0
        %398 = vmatprep.subr.bf16.mxu0 0
        %399 = vmatpush2.bf16.msra.mxu0 0
        %400 = vmatprep.subr.bf16.mxu0 0
        %401 = vmatpush2.bf16.msra.mxu0 0
        %402 = vmatprep.subr.bf16.mxu0 0
        %403 = vmatpush2.bf16.msra.mxu0 0
        %404 = vmatprep.subr.bf16.mxu0 0
        %405 = vmatpush2.bf16.msra.mxu0 0
        %406 = vmatprep.subr.bf16.mxu0 0
        %407 = vmatpush2.bf16.msra.mxu0 0
        %408 = vmatprep.mubr.bf16.mxu0 0
        %409 = vmatmul.mubr.bf16.gmra.mxu0 %v370
        %v410 = vpop.f32.mrf.mxu0
        %v411 = vadd.f32 0.0, %v410
        %v412 = vpop.f32.mrf.mxu0
        %v413 = vpop.f32.mrf.mxu0
        %v414 = vpop.f32.mrf.mxu0
        %415 = vdwg.mxu0
        %v416 = vpack.c.bf16 %v411, %v411
        %vm417 = vcmask 60416
        %418 = vst.msk [vmem:[#allocation2] sm:$0xf] %vm417, %v416
        %419 = vrot.lane.b32.xlu0 %v304, 120
        %v420 = vpop.permute.xlu0 %419
        %421 = vrot.lane.b32.xlu0 %v304, 88
        %v422 = vpop.permute.xlu0 %421
        %v424 = vsel %vm308, %v420, 0
        %v427 = vsel %vm308, %v422, 0
        %429 = vmatprep.subr.bf16.mxu0 0
        %430 = vmatpush1.bf16.xpose.msra.mxu0 0
        %431 = vmatprep.subr.bf16.mxu0 0
        %432 = vmatpush1.bf16.xpose.msra.mxu0 0
        %433 = vmatprep.subr.bf16.mxu0 0
        %434 = vmatpush1.bf16.xpose.msra.mxu0 0
        %435 = vmatprep.subr.bf16.mxu0 0
        %436 = vmatpush1.bf16.xpose.msra.mxu0 0
        %437 = vmatprep.subr.bf16.mxu0 0
        %438 = vmatpush1.bf16.xpose.msra.mxu0 0
        %439 = vmatprep.subr.bf16.mxu0 0
        %440 = vmatpush1.bf16.xpose.msra.mxu0 0
        %441 = vmatprep.subr.bf16.mxu0 0
        %442 = vmatpush1.bf16.xpose.msra.mxu0 0
        %443 = vmatprep.subr.bf16.mxu0 0
        %444 = vmatpush1.bf16.xpose.msra.mxu0 %v427
        %445 = vmatprep.subr.bf16.mxu0 0
        %446 = vmatpush2.bf16.xpose.msra.mxu0 0
        %447 = vmatprep.subr.bf16.mxu0 0
        %448 = vmatpush2.bf16.xpose.msra.mxu0 0
        %449 = vmatprep.subr.bf16.mxu0 0
        %450 = vmatpush2.bf16.xpose.msra.mxu0 0
        %451 = vmatprep.subr.bf16.mxu0 0
        %452 = vmatpush2.bf16.xpose.msra.mxu0 0
        %453 = vmatprep.subr.bf16.mxu0 0
        %454 = vmatpush2.bf16.xpose.msra.mxu0 0
        %455 = vmatprep.subr.bf16.mxu0 0
        %456 = vmatpush2.bf16.xpose.msra.mxu0 0
        %457 = vmatprep.subr.bf16.mxu0 0
        %458 = vmatpush2.bf16.xpose.msra.mxu0 0
        %459 = vmatprep.subr.bf16.mxu0 0
        %460 = vmatpush2.bf16.xpose.msra.mxu0 0
        %461 = vmatprep.mubr.bf16.mxu0 0
        %462 = vmatmul.mubr.bf16.gmra.mxu0 %v424
        %v463 = vpop.f32.mrf.mxu0
        %v464 = vadd.f32 0.0, %v463
        %v465 = vpop.f32.mrf.mxu0
        %v466 = vpop.f32.mrf.mxu0
        %v467 = vpop.f32.mrf.mxu0
        %468 = vdwg.mxu0
        %v469 = vsel %vm308, %v464, -inf
        %470 = vmax.xlane.f32.xlu0 %v469
        %v471 = vpop.xlane.xlu0 %470
        %v472 = vsub.f32 %v464, %v471
        %v473 = vmul.f32 %v472, 1.442695
        %v474 = vpow.pop %v473
        %v475 = vsel %vm308, %v474, 0.0
        %476 = vadd.xlane.f32.xlu0 %v475
        %v477 = vpop.xlane.xlu0 %476
        %v478 = vrcp.pop %v477
        %v479 = vmul.f32 %v474, %v478
        %v480 = vpack.c.bf16 %v479, %v479
        %481 = vrot.lane.b32.xlu0 %v304, 56
        %v482 = vpop.permute.xlu0 %481
        %v484 = vsel %vm308, %v480, 0
        %v487 = vsel %vm372, %v482, 0
        %489 = vmatprep.subr.bf16.mxu0 0
        %490 = vmatpush1.bf16.msra.mxu0 0
        %491 = vmatprep.subr.bf16.mxu0 0
        %492 = vmatpush1.bf16.msra.mxu0 0
        %493 = vmatprep.subr.bf16.mxu0 0
        %494 = vmatpush1.bf16.msra.mxu0 0
        %495 = vmatprep.subr.bf16.mxu0 0
        %496 = vmatpush1.bf16.msra.mxu0 0
        %497 = vmatprep.subr.bf16.mxu0 0
        %498 = vmatpush1.bf16.msra.mxu0 0
        %499 = vmatprep.subr.bf16.mxu0 0
        %500 = vmatpush1.bf16.msra.mxu0 0
        %501 = vmatprep.subr.bf16.mxu0 0
        %502 = vmatpush1.bf16.msra.mxu0 0
        %503 = vmatprep.subr.bf16.mxu0 0
        %504 = vmatpush1.bf16.msra.mxu0 %v487
        %505 = vmatprep.subr.bf16.mxu0 0
        %506 = vmatpush2.bf16.msra.mxu0 0
        %507 = vmatprep.subr.bf16.mxu0 0
        %508 = vmatpush2.bf16.msra.mxu0 0
        %509 = vmatprep.subr.bf16.mxu0 0
        %510 = vmatpush2.bf16.msra.mxu0 0
        %511 = vmatprep.subr.bf16.mxu0 0
        %512 = vmatpush2.bf16.msra.mxu0 0
        %513 = vmatprep.subr.bf16.mxu0 0
        %514 = vmatpush2.bf16.msra.mxu0 0
        %515 = vmatprep.subr.bf16.mxu0 0
        %516 = vmatpush2.bf16.msra.mxu0 0
        %517 = vmatprep.subr.bf16.mxu0 0
        %518 = vmatpush2.bf16.msra.mxu0 0
        %519 = vmatprep.subr.bf16.mxu0 0
        %520 = vmatpush2.bf16.msra.mxu0 0
        %521 = vmatprep.mubr.bf16.mxu0 0
        %522 = vmatmul.mubr.bf16.gmra.mxu0 %v484
        %v523 = vpop.f32.mrf.mxu0
        %v524 = vadd.f32 0.0, %v523
        %v525 = vpop.f32.mrf.mxu0
        %v526 = vpop.f32.mrf.mxu0
        %v527 = vpop.f32.mrf.mxu0
        %528 = vdwg.mxu0
        %v529 = vpack.c.bf16 %v524, %v524
        %v531 = vunpack.c.l.b16 %v529
        %v532 = vpack.c.b16 %v531, %v531
        %533 = vrot.lane.b32.xlu0 %v532, 8
        %v534 = vpop.permute.xlu0 %533
        %vm536 = vcmask 126016
        %537 = vst.msk [vmem:[#allocation2] sm:$0xf] %vm536, %v534
        %538 = vrot.lane.b32.xlu0 %v304, 112
        %v539 = vpop.permute.xlu0 %538
        %540 = vrot.lane.b32.xlu0 %v304, 80
        %v541 = vpop.permute.xlu0 %540
        %v543 = vsel %vm308, %v539, 0
        %v546 = vsel %vm308, %v541, 0
        %548 = vmatprep.subr.bf16.mxu0 0
        %549 = vmatpush1.bf16.xpose.msra.mxu0 0
        %550 = vmatprep.subr.bf16.mxu0 0
        %551 = vmatpush1.bf16.xpose.msra.mxu0 0
        %552 = vmatprep.subr.bf16.mxu0 0
        %553 = vmatpush1.bf16.xpose.msra.mxu0 0
        %554 = vmatprep.subr.bf16.mxu0 0
        %555 = vmatpush1.bf16.xpose.msra.mxu0 0
        %556 = vmatprep.subr.bf16.mxu0 0
        %557 = vmatpush1.bf16.xpose.msra.mxu0 0
        %558 = vmatprep.subr.bf16.mxu0 0
        %559 = vmatpush1.bf16.xpose.msra.mxu0 0
        %560 = vmatprep.subr.bf16.mxu0 0
        %561 = vmatpush1.bf16.xpose.msra.mxu0 0
        %562 = vmatprep.subr.bf16.mxu0 0
        %563 = vmatpush1.bf16.xpose.msra.mxu0 %v546
        %564 = vmatprep.subr.bf16.mxu0 0
        %565 = vmatpush2.bf16.xpose.msra.mxu0 0
        %566 = vmatprep.subr.bf16.mxu0 0
        %567 = vmatpush2.bf16.xpose.msra.mxu0 0
        %568 = vmatprep.subr.bf16.mxu0 0
        %569 = vmatpush2.bf16.xpose.msra.mxu0 0
        %570 = vmatprep.subr.bf16.mxu0 0
        %571 = vmatpush2.bf16.xpose.msra.mxu0 0
        %572 = vmatprep.subr.bf16.mxu0 0
        %573 = vmatpush2.bf16.xpose.msra.mxu0 0
        %574 = vmatprep.subr.bf16.mxu0 0
        %575 = vmatpush2.bf16.xpose.msra.mxu0 0
        %576 = vmatprep.subr.bf16.mxu0 0
        %577 = vmatpush2.bf16.xpose.msra.mxu0 0
        %578 = vmatprep.subr.bf16.mxu0 0
        %579 = vmatpush2.bf16.xpose.msra.mxu0 0
        %580 = vmatprep.mubr.bf16.mxu0 0
        %581 = vmatmul.mubr.bf16.gmra.mxu0 %v543
        %v582 = vpop.f32.mrf.mxu0
        %v583 = vadd.f32 0.0, %v582
        %v584 = vpop.f32.mrf.mxu0
        %v585 = vpop.f32.mrf.mxu0
        %v586 = vpop.f32.mrf.mxu0
        %587 = vdwg.mxu0
        %v588 = vsel %vm308, %v583, -inf
        %589 = vmax.xlane.f32.xlu0 %v588
        %v590 = vpop.xlane.xlu0 %589
        %v591 = vsub.f32 %v583, %v590
        %v592 = vmul.f32 %v591, 1.442695
        %v593 = vpow.pop %v592
        %v594 = vsel %vm308, %v593, 0.0
        %595 = vadd.xlane.f32.xlu0 %v594
        %v596 = vpop.xlane.xlu0 %595
        %v597 = vrcp.pop %v596
        %v598 = vmul.f32 %v593, %v597
        %v599 = vpack.c.bf16 %v598, %v598
        %600 = vrot.lane.b32.xlu0 %v304, 48
        %v601 = vpop.permute.xlu0 %600
        %v603 = vsel %vm308, %v599, 0
        %v606 = vsel %vm372, %v601, 0
        %608 = vmatprep.subr.bf16.mxu0 0
        %609 = vmatpush1.bf16.msra.mxu0 0
        %610 = vmatprep.subr.bf16.mxu0 0
        %611 = vmatpush1.bf16.msra.mxu0 0
        %612 = vmatprep.subr.bf16.mxu0 0
        %613 = vmatpush1.bf16.msra.mxu0 0
        %614 = vmatprep.subr.bf16.mxu0 0
        %615 = vmatpush1.bf16.msra.mxu0 0
        %616 = vmatprep.subr.bf16.mxu0 0
        %617 = vmatpush1.bf16.msra.mxu0 0
        %618 = vmatprep.subr.bf16.mxu0 0
        %619 = vmatpush1.bf16.msra.mxu0 0
        %620 = vmatprep.subr.bf16.mxu0 0
        %621 = vmatpush1.bf16.msra.mxu0 0
        %622 = vmatprep.subr.bf16.mxu0 0
        %623 = vmatpush1.bf16.msra.mxu0 %v606
        %624 = vmatprep.subr.bf16.mxu0 0
        %625 = vmatpush2.bf16.msra.mxu0 0
        %626 = vmatprep.subr.bf16.mxu0 0
        %627 = vmatpush2.bf16.msra.mxu0 0
        %628 = vmatprep.subr.bf16.mxu0 0
        %629 = vmatpush2.bf16.msra.mxu0 0
        %630 = vmatprep.subr.bf16.mxu0 0
        %631 = vmatpush2.bf16.msra.mxu0 0
        %632 = vmatprep.subr.bf16.mxu0 0
        %633 = vmatpush2.bf16.msra.mxu0 0
        %634 = vmatprep.subr.bf16.mxu0 0
        %635 = vmatpush2.bf16.msra.mxu0 0
        %636 = vmatprep.subr.bf16.mxu0 0
        %637 = vmatpush2.bf16.msra.mxu0 0
        %638 = vmatprep.subr.bf16.mxu0 0
        %639 = vmatpush2.bf16.msra.mxu0 0
        %640 = vmatprep.mubr.bf16.mxu0 0
        %641 = vmatmul.mubr.bf16.gmra.mxu0 %v603
        %v642 = vpop.f32.mrf.mxu0
        %v643 = vadd.f32 0.0, %v642
        %v644 = vpop.f32.mrf.mxu0
        %v645 = vpop.f32.mrf.mxu0
        %v646 = vpop.f32.mrf.mxu0
        %647 = vdwg.mxu0
        %v648 = vpack.c.bf16 %v643, %v643
        %v650 = vunpack.c.l.b16 %v648
        %v651 = vpack.c.b16 %v650, %v650
        %652 = vrot.lane.b32.xlu0 %v651, 16
        %v653 = vpop.permute.xlu0 %652
        %vm655 = vcmask 191616
        %656 = vst.msk [vmem:[#allocation2] sm:$0xf] %vm655, %v653
        %657 = vrot.lane.b32.xlu0 %v304, 104
        %v658 = vpop.permute.xlu0 %657
        %659 = vrot.lane.b32.xlu0 %v304, 72
        %v660 = vpop.permute.xlu0 %659
        %v662 = vsel %vm308, %v658, 0
        %v665 = vsel %vm308, %v660, 0
        %667 = vmatprep.subr.bf16.mxu0 0
        %668 = vmatpush1.bf16.xpose.msra.mxu0 0
        %669 = vmatprep.subr.bf16.mxu0 0
        %670 = vmatpush1.bf16.xpose.msra.mxu0 0
        %671 = vmatprep.subr.bf16.mxu0 0
        %672 = vmatpush1.bf16.xpose.msra.mxu0 0
        %673 = vmatprep.subr.bf16.mxu0 0
        %674 = vmatpush1.bf16.xpose.msra.mxu0 0
        %675 = vmatprep.subr.bf16.mxu0 0
        %676 = vmatpush1.bf16.xpose.msra.mxu0 0
        %677 = vmatprep.subr.bf16.mxu0 0
        %678 = vmatpush1.bf16.xpose.msra.mxu0 0
        %679 = vmatprep.subr.bf16.mxu0 0
        %680 = vmatpush1.bf16.xpose.msra.mxu0 0
        %681 = vmatprep.subr.bf16.mxu0 0
        %682 = vmatpush1.bf16.xpose.msra.mxu0 %v665
        %683 = vmatprep.subr.bf16.mxu0 0
        %684 = vmatpush2.bf16.xpose.msra.mxu0 0
        %685 = vmatprep.subr.bf16.mxu0 0
        %686 = vmatpush2.bf16.xpose.msra.mxu0 0
        %687 = vmatprep.subr.bf16.mxu0 0
        %688 = vmatpush2.bf16.xpose.msra.mxu0 0
        %689 = vmatprep.subr.bf16.mxu0 0
        %690 = vmatpush2.bf16.xpose.msra.mxu0 0
        %691 = vmatprep.subr.bf16.mxu0 0
        %692 = vmatpush2.bf16.xpose.msra.mxu0 0
        %693 = vmatprep.subr.bf16.mxu0 0
        %694 = vmatpush2.bf16.xpose.msra.mxu0 0
        %695 = vmatprep.subr.bf16.mxu0 0
        %696 = vmatpush2.bf16.xpose.msra.mxu0 0
        %697 = vmatprep.subr.bf16.mxu0 0
        %698 = vmatpush2.bf16.xpose.msra.mxu0 0
        %699 = vmatprep.mubr.bf16.mxu0 0
        %700 = vmatmul.mubr.bf16.gmra.mxu0 %v662
        %v701 = vpop.f32.mrf.mxu0
        %v702 = vadd.f32 0.0, %v701
        %v703 = vpop.f32.mrf.mxu0
        %v704 = vpop.f32.mrf.mxu0
        %v705 = vpop.f32.mrf.mxu0
        %706 = vdwg.mxu0
        %v707 = vsel %vm308, %v702, -inf
        %708 = vmax.xlane.f32.xlu0 %v707
        %v709 = vpop.xlane.xlu0 %708
        %v710 = vsub.f32 %v702, %v709
        %v711 = vmul.f32 %v710, 1.442695
        %v712 = vpow.pop %v711
        %v713 = vsel %vm308, %v712, 0.0
        %714 = vadd.xlane.f32.xlu0 %v713
        %v715 = vpop.xlane.xlu0 %714
        %v716 = vrcp.pop %v715
        %v717 = vmul.f32 %v712, %v716
        %v718 = vpack.c.bf16 %v717, %v717
        %719 = vrot.lane.b32.xlu0 %v304, 40
        %v720 = vpop.permute.xlu0 %719
        %v722 = vsel %vm308, %v718, 0
        %v725 = vsel %vm372, %v720, 0
        %727 = vmatprep.subr.bf16.mxu0 0
        %728 = vmatpush1.bf16.msra.mxu0 0
        %729 = vmatprep.subr.bf16.mxu0 0
        %730 = vmatpush1.bf16.msra.mxu0 0
        %731 = vmatprep.subr.bf16.mxu0 0
        %732 = vmatpush1.bf16.msra.mxu0 0
        %733 = vmatprep.subr.bf16.mxu0 0
        %734 = vmatpush1.bf16.msra.mxu0 0
        %735 = vmatprep.subr.bf16.mxu0 0
        %736 = vmatpush1.bf16.msra.mxu0 0
        %737 = vmatprep.subr.bf16.mxu0 0
        %738 = vmatpush1.bf16.msra.mxu0 0
        %739 = vmatprep.subr.bf16.mxu0 0
        %740 = vmatpush1.bf16.msra.mxu0 0
        %741 = vmatprep.subr.bf16.mxu0 0
        %742 = vmatpush1.bf16.msra.mxu0 %v725
        %743 = vmatprep.subr.bf16.mxu0 0
        %744 = vmatpush2.bf16.msra.mxu0 0
        %745 = vmatprep.subr.bf16.mxu0 0
        %746 = vmatpush2.bf16.msra.mxu0 0
        %747 = vmatprep.subr.bf16.mxu0 0
        %748 = vmatpush2.bf16.msra.mxu0 0
        %749 = vmatprep.subr.bf16.mxu0 0
        %750 = vmatpush2.bf16.msra.mxu0 0
        %751 = vmatprep.subr.bf16.mxu0 0
        %752 = vmatpush2.bf16.msra.mxu0 0
        %753 = vmatprep.subr.bf16.mxu0 0
        %754 = vmatpush2.bf16.msra.mxu0 0
        %755 = vmatprep.subr.bf16.mxu0 0
        %756 = vmatpush2.bf16.msra.mxu0 0
        %757 = vmatprep.subr.bf16.mxu0 0
        %758 = vmatpush2.bf16.msra.mxu0 0
        %759 = vmatprep.mubr.bf16.mxu0 0
        %760 = vmatmul.mubr.bf16.gmra.mxu0 %v722
        %v761 = vpop.f32.mrf.mxu0
        %v762 = vadd.f32 0.0, %v761
        %v763 = vpop.f32.mrf.mxu0
        %v764 = vpop.f32.mrf.mxu0
        %v765 = vpop.f32.mrf.mxu0
        %766 = vdwg.mxu0
        %v767 = vpack.c.bf16 %v762, %v762
        %v769 = vunpack.c.l.b16 %v767
        %v770 = vpack.c.b16 %v769, %v769
        %771 = vrot.lane.b32.xlu0 %v770, 24
        %v772 = vpop.permute.xlu0 %771
        %vm774 = vcmask 257216
        %775 = vst.msk [vmem:[#allocation2] sm:$0xf] %vm774, %v772
        %v776 = vld [vmem:[#allocation2] sm:$0xf]
        %v777 = vld [vmem:[#allocation8] sm:$0xf]
        %v778 = vld [vmem:[#allocation8 + $0x4] sm:$0xf]
        %v779 = vld [vmem:[#allocation8 + $0x8] sm:$0xf]
        %v780 = vld [vmem:[#allocation8 + $0xc] sm:$0xf]
        %v781 = vld [vmem:[%s3] sm:$0x1]
        %v783 = vlaneseq
        %v784 = vshrl.u32 %v783, 7
        %v785 = vsub.s32 0, %v784
        %v786 = vrot.slane %v781, %v785
        %v792 = vunpack.c.l.b16 %v777
        %v793 = vunpack.c.l.b16 %v778
        %v794 = vunpack.c.l.b16 %v779
        %v795 = vunpack.c.l.b16 %v780
        %v796 = vpack.c.b16 %v793, %v792
        %v797 = vpack.c.b16 %v795, %v794
        %v801 = vsel %vm260, %v776, 0
        %803 = vmatprep.subr.bf16.mxu0 0
        %804 = vmatpush1.bf16.msra.mxu0 0
        %805 = vmatprep.subr.bf16.mxu0 0
        %806 = vmatpush1.bf16.msra.mxu0 0
        %807 = vmatprep.subr.bf16.mxu0 0
        %808 = vmatpush1.bf16.msra.mxu0 0
        %809 = vmatprep.subr.bf16.mxu0 0
        %810 = vmatpush1.bf16.msra.mxu0 0
        %811 = vmatprep.subr.bf16.mxu0 0
        %812 = vmatpush1.bf16.msra.mxu0 0
        %813 = vmatprep.subr.bf16.mxu0 0
        %814 = vmatpush1.bf16.msra.mxu0 0
        %815 = vmatprep.subr.bf16.mxu0 0
        %816 = vmatpush1.bf16.msra.mxu0 %v797
        %817 = vmatprep.subr.bf16.mxu0 0
        %818 = vmatpush1.bf16.msra.mxu0 %v796
        %819 = vmatprep.subr.bf16.mxu0 0
        %820 = vmatpush2.bf16.msra.mxu0 0
        %821 = vmatprep.subr.bf16.mxu0 0
        %822 = vmatpush2.bf16.msra.mxu0 0
        %823 = vmatprep.subr.bf16.mxu0 0
        %824 = vmatpush2.bf16.msra.mxu0 0
        %825 = vmatprep.subr.bf16.mxu0 0
        %826 = vmatpush2.bf16.msra.mxu0 0
        %827 = vmatprep.subr.bf16.mxu0 0
        %828 = vmatpush2.bf16.msra.mxu0 0
        %829 = vmatprep.subr.bf16.mxu0 0
        %830 = vmatpush2.bf16.msra.mxu0 0
        %831 = vmatprep.subr.bf16.mxu0 0
        %832 = vmatpush2.bf16.msra.mxu0 0
        %833 = vmatprep.subr.bf16.mxu0 0
        %834 = vmatpush2.bf16.msra.mxu0 0
        %835 = vmatprep.mubr.bf16.mxu0 0
        %836 = vmatmul.mubr.bf16.gmra.mxu0 %v801
        %v837 = vpop.f32.mrf.mxu0
        %v838 = vadd.f32 %v786, %v837
        %v839 = vpop.f32.mrf.mxu0
        %v840 = vpop.f32.mrf.mxu0
        %v841 = vpop.f32.mrf.mxu0
        %842 = vdwg.mxu0
        %843 = vst.msk [vmem:[%s241] sm:$0xff] %vm260, %v838
        %s844 = sand.u32 %s119, 1
        %s845 = scalar_lea.sflag [#allocation5], %s844
        %s846 = sand.u32 %s119, 1
        %s847 = smul.addr %s846, 8
        %s848 = scalar_lea.vmem [#allocation9], %s847
        // Predicated region
        $region49: #{tpu_custom_call.1} parent=35 // pred_check
          %p849 = pneg %p129
        $region50: #{tpu_custom_call.1} parent=35 // pred_check_branch
          %851 = sbr.rel (%p849) target = $region52
        $region51: #{tpu_custom_call.1} parent=35 // pred_region
          %s853 = ssub.s32 128, 128
          %854 = vsyncadd %s845, %s853
          %s855 = smul.addr %s22, 128
          %s856 = scalar_lea.hbm %s4, %s855
          %s858 = sshll.u32 %s848, 4
          %s859 = int_to_ptr.vmem [resolvable:$true] %s858
          %861 = dma.vmem_to_hbm [thread:$0]  %s859, 128, %s856, %s845
        $region52: #{tpu_custom_call.1} parent=35 // pred_fallthru
          _
      $region36: #{tpu_custom_call.1} parent=5 // pred_fallthru
        _
      %p862 = scmp.le.s32.totalorder 2, %s17
      // Predicated region
      $region53: #{tpu_custom_call.1} parent=5 // pred_check
        %p863 = pneg %p862
      $region54: #{tpu_custom_call.1} parent=5 // pred_check_branch
        %865 = sbr.rel (%p863) target = $region56
      $region55: #{tpu_custom_call.1} parent=5 // pred_region
        %s866 = ssub.s32 %s17, 2
        // Predicated region
        $region57: #{tpu_custom_call.1} parent=55 // pred_check
          %p867 = pneg %p135
        $region58: #{tpu_custom_call.1} parent=55 // pred_check_branch
          %869 = sbr.rel (%p867) target = $region60
        $region59: #{tpu_custom_call.1} parent=55 // pred_region
          %s870 = sand.u32 %s120, 1
          %s871 = scalar_lea.sflag [#allocation5], %s870
          %s872 = sand.u32 %s120, 1
          %s873 = smul.addr %s872, 8
          %s874 = scalar_lea.vmem [#allocation9], %s873
          %875 = dma.done %s871, 128
        $region60: #{tpu_custom_call.1} parent=55 // pred_fallthru
          _
      $region56: #{tpu_custom_call.1} parent=5 // pred_fallthru
        _
    $region6: #{tpu_custom_call.1} parent=1 // loop_footer
      %s21 = sadd.s32 1, %s17
    $region7: #{tpu_custom_call.1} parent=1 // loop_footer_branch
      %16 = sbr.rel target = $region3
    $region8: #{tpu_custom_call.1} parent=1 // loop_exit
      _
    %876 = vsyncpa [#allocation4], 1
    %s877 = scalar_lea.sflag [#allocation4], 1
    %878 = vsyncpa %s877, 1
    %879 = vsyncpa [#allocation7], 1
    %880 = vsyncpa [#allocation5], 1
    %s881 = scalar_lea.sflag [#allocation5], 1
    %882 = vsyncpa %s881, 1

</llo_original>
